<compile_context>
chip_gen: v6e
topology: v6e:2x2x1
jax: 0.10.0
libtpu: 0.0.40
codegen_flags: <defaults>
</compile_context>

<pallas_src>
import jax
import jax.numpy as jnp
from jax import lax
from jax.experimental import pallas as pl
from jax.experimental.pallas import tpu as pltpu

# Static problem sizes (small, per the prompt)
N, CIN, H, W = 2, 4, 16, 16
CH, COUT, K = 8, 2, 3
P = N * H * W                 # 512 pixels on the lane axis
RIN = CIN * K * K + 1         # 37 im2col rows (+1 ones-row carrying b1)


def _model_kernel(xcol_ref, w1_ref, w2_ref, b2_ref, out_ref):
    """Single invocation; everything resident in VMEM.

    xcol_ref: (RIN, P)   im2col'd input with ones-row appended (lane-dense)
    w1_ref  : (CH, RIN)  fused backbone weights (bias in last column)
    w2_ref  : (COUT, CH) decoder 1x1 weights
    b2_ref  : (COUT, 1)  decoder bias
    out_ref : (COUT, P)  lane-dense output
    """
    feat = jnp.maximum(
        jnp.dot(w1_ref[...], xcol_ref[...],
                preferred_element_type=jnp.float32),
        0.0)                                               # (CH, P) backbone+ReLU
    out_ref[...] = (
        jnp.dot(w2_ref[...], feat, preferred_element_type=jnp.float32)
        + b2_ref[...])                                     # (COUT, P) decoder


def basic_model_forward(x_nchw, w1, b1, w2, b2):
    """x_nchw: (N, CIN, H, W) f32; w1: (CH, CIN, K, K) (OIHW); b1: (CH,);
    w2: (COUT, CH, 1, 1) (OIHW); b2: (COUT,)  ->  (N, COUT, H, W) f32."""
    # ---- glue (XLA): im2col with (channel, tap) on rows, pixels on lanes ----
    x_pad = jnp.pad(x_nchw, ((0, 0), (0, 0), (1, 1), (1, 1)))
    taps = [x_pad[:, :, kh:kh + H, kw:kw + W]              # each (N, CIN, H, W)
            for kh in range(K) for kw in range(K)]
    taps = jnp.stack(taps, axis=2)                         # (N, CIN, K*K, H, W)
    x_col = taps.transpose(1, 2, 0, 3, 4).reshape(CIN * K * K, P)
    x_aug = jnp.concatenate(
        [x_col, jnp.ones((1, P), jnp.float32)], axis=0)    # (RIN, P)

    # Fold b1 into the backbone weight matrix (matches x_aug's ones-row).
    w1_aug = jnp.concatenate(
        [w1.reshape(CH, CIN * K * K), b1.reshape(CH, 1)], axis=1)  # (CH, RIN)
    w2_mat = w2.reshape(COUT, CH)
    b2_col = b2.reshape(COUT, 1)

    out = pl.pallas_call(
        _model_kernel,
        out_shape=jax.ShapeDtypeStruct((COUT, P), jnp.float32),
        in_specs=[
            pl.BlockSpec(memory_space=pltpu.MemorySpace.VMEM),
            pl.BlockSpec(memory_space=pltpu.MemorySpace.VMEM),
            pl.BlockSpec(memory_space=pltpu.MemorySpace.VMEM),
            pl.BlockSpec(memory_space=pltpu.MemorySpace.VMEM),
        ],
        out_specs=pl.BlockSpec(memory_space=pltpu.MemorySpace.VMEM),
    )(x_aug, w1_aug, w2_mat, b2_col)

    # (COUT, N*H*W) -> (N, COUT, H, W): cheap reshape/transpose in XLA.
    return out.reshape(COUT, N, H, W).transpose(1, 0, 2, 3)


def _reference(x_nchw, w1, b1, w2, b2):
    """Pure-JAX reference (lax.conv) matching PyTorch conv semantics."""
    feat = lax.conv_general_dilated(
        x_nchw, w1, window_strides=(1, 1), padding="SAME",
        dimension_numbers=("NCHW", "OIHW", "NCHW"))
    feat = jnp.maximum(feat + b1.reshape(1, CH, 1, 1), 0.0)
    out = lax.conv_general_dilated(
        feat, w2, window_strides=(1, 1), padding="VALID",
        dimension_numbers=("NCHW", "OIHW", "NCHW"))
    return out + b2.reshape(1, COUT, 1, 1)


if __name__ == "__main__":
    key = jax.random.PRNGKey(0)
    kx, k1, k2, k3, k4 = jax.random.split(key, 5)

    x = jax.random.normal(kx, (N, CIN, H, W), jnp.float32)
    # Deterministic parameter init (synthetic weights, PyTorch OIHW layout).
    w1 = jax.random.normal(k1, (CH, CIN, K, K), jnp.float32) * 0.1
    b1 = jax.random.normal(k2, (CH,), jnp.float32) * 0.1
    w2 = jax.random.normal(k3, (COUT, CH, 1, 1), jnp.float32) * 0.1
    b2 = jax.random.normal(k4, (COUT,), jnp.float32) * 0.1

    out = basic_model_forward(x, w1, b1, w2, b2)
    out = jax.block_until_ready(out)

    ref = _reference(x, w1, b1, w2, b2)
    assert out.shape == (N, COUT, H, W)
    assert jnp.allclose(out, ref, atol=1e-4, rtol=1e-4)

    print("KERNEL_OK")
</pallas_src>

<mosaic_0001>
module attributes {stable_mosaic.version = 11 : i64} {
  func.func @_model_kernel(%arg0: memref<37x512xf32, #tpu.memory_space<vmem>>, %arg1: memref<8x37xf32, #tpu.memory_space<vmem>>, %arg2: memref<2x8xf32, #tpu.memory_space<vmem>>, %arg3: memref<2x1xf32, #tpu.memory_space<vmem>>, %arg4: memref<2x512xf32, #tpu.memory_space<vmem>>) attributes {dimension_semantics = [], scalar_prefetch = 0 : i64, scratch_operands = 0 : i64, tpu.core_type = #tpu.core_type<tc>} {
    %c0 = arith.constant 0 : index
    %c0_0 = arith.constant 0 : index
    %0 = vector.load %arg1[%c0, %c0_0] : memref<8x37xf32, #tpu.memory_space<vmem>>, vector<8x37xf32>
    %c0_1 = arith.constant 0 : index
    %c0_2 = arith.constant 0 : index
    %1 = vector.load %arg0[%c0_1, %c0_2] : memref<37x512xf32, #tpu.memory_space<vmem>>, vector<37x512xf32>
    %cst = arith.constant dense<0.000000e+00> : vector<8x512xf32>
    %2 = tpu.matmul %0, %1, %cst {dimension_numbers = #tpu.dot_dimension_numbers<[1], [0], [0], [1], [0, 0, 1, 1], [], []>} : vector<8x37xf32>, vector<37x512xf32>, vector<8x512xf32> -> vector<8x512xf32>
    %cst_3 = arith.constant 0.000000e+00 : f32
    %3 = vector.broadcast %cst_3 : f32 to vector<8x512xf32>
    %4 = arith.maximumf %2, %3 : vector<8x512xf32>
    %c0_4 = arith.constant 0 : index
    %c0_5 = arith.constant 0 : index
    %5 = vector.load %arg2[%c0_4, %c0_5] : memref<2x8xf32, #tpu.memory_space<vmem>>, vector<2x8xf32>
    %cst_6 = arith.constant dense<0.000000e+00> : vector<2x512xf32>
    %6 = tpu.matmul %5, %4, %cst_6 {dimension_numbers = #tpu.dot_dimension_numbers<[1], [0], [0], [1], [0, 0, 1, 1], [], []>} : vector<2x8xf32>, vector<8x512xf32>, vector<2x512xf32> -> vector<2x512xf32>
    %c0_7 = arith.constant 0 : index
    %c0_8 = arith.constant 0 : index
    %7 = vector.load %arg3[%c0_7, %c0_8] : memref<2x1xf32, #tpu.memory_space<vmem>>, vector<2x1xf32>
    %8 = vector.broadcast %7 : vector<2x1xf32> to vector<2x512xf32>
    %9 = arith.addf %6, %8 : vector<2x512xf32>
    %c0_9 = arith.constant 0 : index
    %c0_10 = arith.constant 0 : index
    %10 = vector.load %arg4[%c0_9, %c0_10] : memref<2x512xf32, #tpu.memory_space<vmem>>, vector<2x512xf32>
    tpu.vector_store %arg4[%c0_9, %c0_10], %9 {strides = array<i32>} : memref<2x512xf32, #tpu.memory_space<vmem>>, vector<2x512xf32>,
    return
  }
}

</mosaic_0001>

<llo_original>
// kernel: tpu_custom_call.1
$region0: #{tpu_custom_call.1}
  #allocation0 [shape = 'u32[]', space=smem, size = 0x4, offset = 0x4, fixed_abs, tag = 'smem constant byte address 0x4 - core index']
  #allocation1 [shape = 'u32[144,128]{1,0:T(1,128)}', space=vmem, size = 0x12000, scoped, tag = 'internal scratch']
  %s0 = inlined_call_operand.hbm [shape: f32[37,512], index: 0, kind: input, shape index: {}]
  %s1 = inlined_call_operand.hbm [shape: f32[8,37], index: 1, kind: input, shape index: {}]
  %s2 = inlined_call_operand.vmem [shape: f32[2,8], index: 2, kind: input, shape index: {}]
  %s3 = inlined_call_operand.vmem [shape: f32[2,1], index: 3, kind: input, shape index: {}]
  %s4 = inlined_call_operand.hbm [shape: f32[2,512], index: 4, kind: output, shape index: {}]
  %s5 = sld [smem:[#allocation0]]
  $region34: #{tpu_custom_call.1} parent=0
    _
  %s7 = ssub.s32 1, %s5
  %s8 = scalar_select 0, %s7, %s5
  $region1: #{tpu_custom_call.1} parent=0
    #allocation2 [shape = 'u8[81920]{0}', space=vmem, size = 0x14000, scoped, tag = 'input window, operand 0, single buffered']
    #allocation3 [shape = 's32[1]{0}', space=sflag, size = 0x4, scoped, tag = 'scoped memory for tpu_custom_call.1']
    #allocation4 [shape = 's32[1]{0}', space=sflag, size = 0x4, scoped, tag = 'scoped memory for tpu_custom_call.1']
    #allocation5 [shape = 'u8[4096]{0}', space=vmem, size = 0x1000, scoped, tag = 'input window, operand 1, single buffered']
    #allocation6 [shape = 's32[1]{0}', space=sflag, size = 0x4, scoped, tag = 'scoped memory for tpu_custom_call.1']
    #allocation7 [shape = 'u8[4096]{0}', space=vmem, size = 0x1000, scoped, tag = 'output window, operand 0, single buffered']
    %9 = vsyncpa [#allocation3], 0
    %10 = vsyncpa [#allocation6], 0
    %11 = vsyncpa [#allocation4], 0
    // Predicated region
    $region2: #{tpu_custom_call.1} parent=1 // pred_check
      _
    $region3: #{tpu_custom_call.1} parent=1 // pred_check_branch
      %13 = sbr.rel (0) target = $region5
    $region4: #{tpu_custom_call.1} parent=1 // pred_region
      %s15 = ssub.s32 2560, 2560
      %16 = vsyncadd [#allocation3], %s15
      %s17 = sshll.u32 [#allocation2], 4
      %s18 = int_to_ptr.vmem [resolvable:$true] %s17
      %23 = dma.hbm_to_vmem [thread:$0]  %s0, 2560, %s18, [#allocation3], 512, 512, 32
    $region5: #{tpu_custom_call.1} parent=1 // pred_fallthru
      _
    // Predicated region
    $region6: #{tpu_custom_call.1} parent=1 // pred_check
      _
    $region7: #{tpu_custom_call.1} parent=1 // pred_check_branch
      %25 = sbr.rel (0) target = $region9
    $region8: #{tpu_custom_call.1} parent=1 // pred_region
      %s27 = ssub.s32 128, 128
      %28 = vsyncadd [#allocation6], %s27
      %s30 = sshll.u32 [#allocation5], 4
      %s31 = int_to_ptr.vmem [resolvable:$true] %s30
      %33 = dma.hbm_to_vmem [thread:$0]  %s1, 128, %s31, [#allocation6]
    $region9: #{tpu_custom_call.1} parent=1 // pred_fallthru
      _
    // Predicated region
    $region10: #{tpu_custom_call.1} parent=1 // pred_check
      _
    $region11: #{tpu_custom_call.1} parent=1 // pred_check_branch
      %35 = sbr.rel (0) target = $region13
    $region12: #{tpu_custom_call.1} parent=1 // pred_region
      _
    $region13: #{tpu_custom_call.1} parent=1 // pred_fallthru
      _
    // Predicated region
    $region14: #{tpu_custom_call.1} parent=1 // pred_check
      _
    $region15: #{tpu_custom_call.1} parent=1 // pred_check_branch
      %37 = sbr.rel (0) target = $region17
    $region16: #{tpu_custom_call.1} parent=1 // pred_region
      _
    $region17: #{tpu_custom_call.1} parent=1 // pred_fallthru
      _
    // Predicated region
    $region18: #{tpu_custom_call.1} parent=1 // pred_check
      _
    $region19: #{tpu_custom_call.1} parent=1 // pred_check_branch
      %39 = sbr.rel (0) target = $region21
    $region20: #{tpu_custom_call.1} parent=1 // pred_region
      %40 = dma.done [#allocation3], 2560
    $region21: #{tpu_custom_call.1} parent=1 // pred_fallthru
      _
    // Predicated region
    $region22: #{tpu_custom_call.1} parent=1 // pred_check
      _
    $region23: #{tpu_custom_call.1} parent=1 // pred_check_branch
      %42 = sbr.rel (0) target = $region25
    $region24: #{tpu_custom_call.1} parent=1 // pred_region
      %43 = dma.done [#allocation6], 128
    $region25: #{tpu_custom_call.1} parent=1 // pred_fallthru
      _
    %v44 = vld [vmem:[#allocation5] sm:$0xff]
    %v45 = vld [vmem:[#allocation2] sm:$0xff]
    %v46 = vld [vmem:[#allocation2 + $0x8] sm:$0xff]
    %v47 = vld [vmem:[#allocation2 + $0x10] sm:$0xff]
    %v48 = vld [vmem:[#allocation2 + $0x18] sm:$0xff]
    %v49 = vld [vmem:[#allocation2 + $0x20] sm:$0xff]
    %v50 = vld [vmem:[#allocation2 + $0x28] sm:$0xff]
    %v51 = vld [vmem:[#allocation2 + $0x30] sm:$0xff]
    %v52 = vld [vmem:[#allocation2 + $0x38] sm:$0xff]
    %v53 = vld [vmem:[#allocation2 + $0x40] sm:$0xff]
    %v54 = vld [vmem:[#allocation2 + $0x48] sm:$0xff]
    %v55 = vld [vmem:[#allocation2 + $0x50] sm:$0xff]
    %v56 = vld [vmem:[#allocation2 + $0x58] sm:$0xff]
    %v57 = vld [vmem:[#allocation2 + $0x60] sm:$0xff]
    %v58 = vld [vmem:[#allocation2 + $0x68] sm:$0xff]
    %v59 = vld [vmem:[#allocation2 + $0x70] sm:$0xff]
    %v60 = vld [vmem:[#allocation2 + $0x78] sm:$0xff]
    %v61 = vld [vmem:[#allocation2 + $0x80] sm:$0x1f]
    %v62 = vld [vmem:[#allocation2 + $0x88] sm:$0x1f]
    %v63 = vld [vmem:[#allocation2 + $0x90] sm:$0x1f]
    %v64 = vld [vmem:[#allocation2 + $0x98] sm:$0x1f]
    %vm65 = vcmask 302080
    %v67 = vsel %vm65, %v44, 0
    %vm69 = vcmask 1044480
    %v71 = vsel %vm69, %v61, 0
    %v74 = vsel %vm69, %v62, 0
    %v77 = vsel %vm69, %v63, 0
    %v80 = vsel %vm69, %v64, 0
    %82 = vmatprep.subr.mxu0 0.0
    %83 = vmatpush1.msra.mxu0 0.0
    %84 = vmatprep.subr.mxu0 0.0
    %85 = vmatpush1.msra.mxu0 0.0
    %86 = vmatprep.subr.mxu0 0.0
    %87 = vmatpush1.msra.mxu0 0.0
    %88 = vmatprep.subr.mxu0 0.0
    %89 = vmatpush1.msra.mxu0 0.0
    %90 = vmatprep.subr.mxu0 0.0
    %91 = vmatpush1.msra.mxu0 0.0
    %92 = vmatprep.subr.mxu0 0.0
    %93 = vmatpush1.msra.mxu0 0.0
    %94 = vmatprep.subr.mxu0 0.0
    %95 = vmatpush1.msra.mxu0 0.0
    %96 = vmatprep.subr.mxu0 0.0
    %97 = vmatpush1.msra.mxu0 0.0
    %98 = vmatprep.subr.mxu0 0.0
    %99 = vmatpush1.msra.mxu0 0.0
    %100 = vmatprep.subr.mxu0 0.0
    %101 = vmatpush1.msra.mxu0 0.0
    %102 = vmatprep.subr.mxu0 0.0
    %103 = vmatpush1.msra.mxu0 0.0
    %104 = vmatprep.subr.mxu0 %v74
    %105 = vmatpush1.msra.mxu0 %v71
    %106 = vmatprep.subr.mxu0 %v58
    %107 = vmatpush1.msra.mxu0 %v57
    %108 = vmatprep.subr.mxu0 %v54
    %109 = vmatpush1.msra.mxu0 %v53
    %110 = vmatprep.subr.mxu0 %v50
    %111 = vmatpush1.msra.mxu0 %v49
    %112 = vmatprep.subr.mxu0 %v46
    %113 = vmatpush1.msra.mxu0 %v45
    %114 = vmatprep.subr.mxu0 0.0
    %115 = vmatpush2.msra.mxu0 0.0
    %116 = vmatprep.subr.mxu0 0.0
    %117 = vmatpush2.msra.mxu0 0.0
    %118 = vmatprep.subr.mxu0 0.0
    %119 = vmatpush2.msra.mxu0 0.0
    %120 = vmatprep.subr.mxu0 0.0
    %121 = vmatpush2.msra.mxu0 0.0
    %122 = vmatprep.subr.mxu0 0.0
    %123 = vmatpush2.msra.mxu0 0.0
    %124 = vmatprep.subr.mxu0 0.0
    %125 = vmatpush2.msra.mxu0 0.0
    %126 = vmatprep.subr.mxu0 0.0
    %127 = vmatpush2.msra.mxu0 0.0
    %128 = vmatprep.subr.mxu0 0.0
    %129 = vmatpush2.msra.mxu0 0.0
    %130 = vmatprep.subr.mxu0 0.0
    %131 = vmatpush2.msra.mxu0 0.0
    %132 = vmatprep.subr.mxu0 0.0
    %133 = vmatpush2.msra.mxu0 0.0
    %134 = vmatprep.subr.mxu0 0.0
    %135 = vmatpush2.msra.mxu0 0.0
    %136 = vmatprep.subr.mxu0 0.0
    %137 = vmatpush2.msra.mxu0 0.0
    %138 = vmatprep.subr.mxu0 0.0
    %139 = vmatpush2.msra.mxu0 0.0
    %140 = vmatprep.subr.mxu0 0.0
    %141 = vmatpush2.msra.mxu0 0.0
    %142 = vmatprep.subr.mxu0 0.0
    %143 = vmatpush2.msra.mxu0 0.0
    %144 = vmatprep.subr.mxu0 0.0
    %145 = vmatpush2.msra.mxu0 0.0
    %146 = vmatprep.mubr.f32.mxu0 0.0
    %147 = vmatmul.mubr.f32.gmra.mxu0 %v67
    %v148 = vpop.f32.mrf.mxu0
    %v149 = vadd.f32 0.0, %v148
    %v150 = vpop.f32.mrf.mxu0
    %v151 = vadd.f32 0.0, %v150
    %152 = vdwg.mxu0
    %153 = vmatprep.subr.mxu0 0.0
    %154 = vmatpush1.msra.mxu0 0.0
    %155 = vmatprep.subr.mxu0 0.0
    %156 = vmatpush1.msra.mxu0 0.0
    %157 = vmatprep.subr.mxu0 0.0
    %158 = vmatpush1.msra.mxu0 0.0
    %159 = vmatprep.subr.mxu0 0.0
    %160 = vmatpush1.msra.mxu0 0.0
    %161 = vmatprep.subr.mxu0 0.0
    %162 = vmatpush1.msra.mxu0 0.0
    %163 = vmatprep.subr.mxu0 0.0
    %164 = vmatpush1.msra.mxu0 0.0
    %165 = vmatprep.subr.mxu0 0.0
    %166 = vmatpush1.msra.mxu0 0.0
    %167 = vmatprep.subr.mxu0 0.0
    %168 = vmatpush1.msra.mxu0 0.0
    %169 = vmatprep.subr.mxu0 0.0
    %170 = vmatpush1.msra.mxu0 0.0
    %171 = vmatprep.subr.mxu0 0.0
    %172 = vmatpush1.msra.mxu0 0.0
    %173 = vmatprep.subr.mxu0 0.0
    %174 = vmatpush1.msra.mxu0 0.0
    %175 = vmatprep.subr.mxu0 %v80
    %176 = vmatpush1.msra.mxu0 %v77
    %177 = vmatprep.subr.mxu0 %v60
    %178 = vmatpush1.msra.mxu0 %v59
    %179 = vmatprep.subr.mxu0 %v56
    %180 = vmatpush1.msra.mxu0 %v55
    %181 = vmatprep.subr.mxu0 %v52
    %182 = vmatpush1.msra.mxu0 %v51
    %183 = vmatprep.subr.mxu0 %v48
    %184 = vmatpush1.msra.mxu0 %v47
    %185 = vmatprep.subr.mxu0 0.0
    %186 = vmatpush2.msra.mxu0 0.0
    %187 = vmatprep.subr.mxu0 0.0
    %188 = vmatpush2.msra.mxu0 0.0
    %189 = vmatprep.subr.mxu0 0.0
    %190 = vmatpush2.msra.mxu0 0.0
    %191 = vmatprep.subr.mxu0 0.0
    %192 = vmatpush2.msra.mxu0 0.0
    %193 = vmatprep.subr.mxu0 0.0
    %194 = vmatpush2.msra.mxu0 0.0
    %195 = vmatprep.subr.mxu0 0.0
    %196 = vmatpush2.msra.mxu0 0.0
    %197 = vmatprep.subr.mxu0 0.0
    %198 = vmatpush2.msra.mxu0 0.0
    %199 = vmatprep.subr.mxu0 0.0
    %200 = vmatpush2.msra.mxu0 0.0
    %201 = vmatprep.subr.mxu0 0.0
    %202 = vmatpush2.msra.mxu0 0.0
    %203 = vmatprep.subr.mxu0 0.0
    %204 = vmatpush2.msra.mxu0 0.0
    %205 = vmatprep.subr.mxu0 0.0
    %206 = vmatpush2.msra.mxu0 0.0
    %207 = vmatprep.subr.mxu0 0.0
    %208 = vmatpush2.msra.mxu0 0.0
    %209 = vmatprep.subr.mxu0 0.0
    %210 = vmatpush2.msra.mxu0 0.0
    %211 = vmatprep.subr.mxu0 0.0
    %212 = vmatpush2.msra.mxu0 0.0
    %213 = vmatprep.subr.mxu0 0.0
    %214 = vmatpush2.msra.mxu0 0.0
    %215 = vmatprep.subr.mxu0 0.0
    %216 = vmatpush2.msra.mxu0 0.0
    %217 = vmatprep.mubr.f32.mxu0 0.0
    %218 = vmatmul.mubr.f32.gmra.mxu0 %v67
    %v219 = vpop.f32.mrf.mxu0
    %v220 = vadd.f32 0.0, %v219
    %v221 = vpop.f32.mrf.mxu0
    %v222 = vadd.f32 0.0, %v221
    %223 = vdwg.mxu0
    %v224 = vmax.f32 %v149, 0.0
    %v225 = vmax.f32 %v151, 0.0
    %v226 = vmax.f32 %v220, 0.0
    %v227 = vmax.f32 %v222, 0.0
    %v228 = vld [vmem:[%s2] sm:$0x3]
    %v229 = vld [vmem:[%s3] sm:$0x3]
    %231 = vset.pattern.permute.xlu0 0
    %232 = vperm.xlu0 %231, %v229
    %v233 = vpop.permute.xlu0 %232
    %vm235 = vcmask 64512
    %v237 = vsel %vm235, %v228, 0
    %239 = vmatprep.subr.mxu0 0.0
    %240 = vmatpush1.msra.mxu0 0.0
    %241 = vmatprep.subr.mxu0 0.0
    %242 = vmatpush1.msra.mxu0 0.0
    %243 = vmatprep.subr.mxu0 0.0
    %244 = vmatpush1.msra.mxu0 0.0
    %245 = vmatprep.subr.mxu0 0.0
    %246 = vmatpush1.msra.mxu0 0.0
    %247 = vmatprep.subr.mxu0 0.0
    %248 = vmatpush1.msra.mxu0 0.0
    %249 = vmatprep.subr.mxu0 0.0
    %250 = vmatpush1.msra.mxu0 0.0
    %251 = vmatprep.subr.mxu0 0.0
    %252 = vmatpush1.msra.mxu0 0.0
    %253 = vmatprep.subr.mxu0 0.0
    %254 = vmatpush1.msra.mxu0 0.0
    %255 = vmatprep.subr.mxu0 0.0
    %256 = vmatpush1.msra.mxu0 0.0
    %257 = vmatprep.subr.mxu0 0.0
    %258 = vmatpush1.msra.mxu0 0.0
    %259 = vmatprep.subr.mxu0 0.0
    %260 = vmatpush1.msra.mxu0 0.0
    %261 = vmatprep.subr.mxu0 0.0
    %262 = vmatpush1.msra.mxu0 0.0
    %263 = vmatprep.subr.mxu0 0.0
    %264 = vmatpush1.msra.mxu0 0.0
    %265 = vmatprep.subr.mxu0 0.0
    %266 = vmatpush1.msra.mxu0 0.0
    %267 = vmatprep.subr.mxu0 0.0
    %268 = vmatpush1.msra.mxu0 0.0
    %269 = vmatprep.subr.mxu0 %v225
    %270 = vmatpush1.msra.mxu0 %v224
    %271 = vmatprep.subr.mxu0 0.0
    %272 = vmatpush2.msra.mxu0 0.0
    %273 = vmatprep.subr.mxu0 0.0
    %274 = vmatpush2.msra.mxu0 0.0
    %275 = vmatprep.subr.mxu0 0.0
    %276 = vmatpush2.msra.mxu0 0.0
    %277 = vmatprep.subr.mxu0 0.0
    %278 = vmatpush2.msra.mxu0 0.0
    %279 = vmatprep.subr.mxu0 0.0
    %280 = vmatpush2.msra.mxu0 0.0
    %281 = vmatprep.subr.mxu0 0.0
    %282 = vmatpush2.msra.mxu0 0.0
    %283 = vmatprep.subr.mxu0 0.0
    %284 = vmatpush2.msra.mxu0 0.0
    %285 = vmatprep.subr.mxu0 0.0
    %286 = vmatpush2.msra.mxu0 0.0
    %287 = vmatprep.subr.mxu0 0.0
    %288 = vmatpush2.msra.mxu0 0.0
    %289 = vmatprep.subr.mxu0 0.0
    %290 = vmatpush2.msra.mxu0 0.0
    %291 = vmatprep.subr.mxu0 0.0
    %292 = vmatpush2.msra.mxu0 0.0
    %293 = vmatprep.subr.mxu0 0.0
    %294 = vmatpush2.msra.mxu0 0.0
    %295 = vmatprep.subr.mxu0 0.0
    %296 = vmatpush2.msra.mxu0 0.0
    %297 = vmatprep.subr.mxu0 0.0
    %298 = vmatpush2.msra.mxu0 0.0
    %299 = vmatprep.subr.mxu0 0.0
    %300 = vmatpush2.msra.mxu0 0.0
    %301 = vmatprep.subr.mxu0 0.0
    %302 = vmatpush2.msra.mxu0 0.0
    %303 = vmatprep.mubr.f32.mxu0 0.0
    %304 = vmatmul.mubr.f32.gmra.mxu0 %v237
    %v305 = vpop.f32.mrf.mxu0
    %v306 = vadd.f32 %v233, %v305
    %v307 = vpop.f32.mrf.mxu0
    %v308 = vadd.f32 %v233, %v307
    %309 = vdwg.mxu0
    %310 = vmatprep.subr.mxu0 0.0
    %311 = vmatpush1.msra.mxu0 0.0
    %312 = vmatprep.subr.mxu0 0.0
    %313 = vmatpush1.msra.mxu0 0.0
    %314 = vmatprep.subr.mxu0 0.0
    %315 = vmatpush1.msra.mxu0 0.0
    %316 = vmatprep.subr.mxu0 0.0
    %317 = vmatpush1.msra.mxu0 0.0
    %318 = vmatprep.subr.mxu0 0.0
    %319 = vmatpush1.msra.mxu0 0.0
    %320 = vmatprep.subr.mxu0 0.0
    %321 = vmatpush1.msra.mxu0 0.0
    %322 = vmatprep.subr.mxu0 0.0
    %323 = vmatpush1.msra.mxu0 0.0
    %324 = vmatprep.subr.mxu0 0.0
    %325 = vmatpush1.msra.mxu0 0.0
    %326 = vmatprep.subr.mxu0 0.0
    %327 = vmatpush1.msra.mxu0 0.0
    %328 = vmatprep.subr.mxu0 0.0
    %329 = vmatpush1.msra.mxu0 0.0
    %330 = vmatprep.subr.mxu0 0.0
    %331 = vmatpush1.msra.mxu0 0.0
    %332 = vmatprep.subr.mxu0 0.0
    %333 = vmatpush1.msra.mxu0 0.0
    %334 = vmatprep.subr.mxu0 0.0
    %335 = vmatpush1.msra.mxu0 0.0
    %336 = vmatprep.subr.mxu0 0.0
    %337 = vmatpush1.msra.mxu0 0.0
    %338 = vmatprep.subr.mxu0 0.0
    %339 = vmatpush1.msra.mxu0 0.0
    %340 = vmatprep.subr.mxu0 %v227
    %341 = vmatpush1.msra.mxu0 %v226
    %342 = vmatprep.subr.mxu0 0.0
    %343 = vmatpush2.msra.mxu0 0.0
    %344 = vmatprep.subr.mxu0 0.0
    %345 = vmatpush2.msra.mxu0 0.0
    %346 = vmatprep.subr.mxu0 0.0
    %347 = vmatpush2.msra.mxu0 0.0
    %348 = vmatprep.subr.mxu0 0.0
    %349 = vmatpush2.msra.mxu0 0.0
    %350 = vmatprep.subr.mxu0 0.0
    %351 = vmatpush2.msra.mxu0 0.0
    %352 = vmatprep.subr.mxu0 0.0
    %353 = vmatpush2.msra.mxu0 0.0
    %354 = vmatprep.subr.mxu0 0.0
    %355 = vmatpush2.msra.mxu0 0.0
    %356 = vmatprep.subr.mxu0 0.0
    %357 = vmatpush2.msra.mxu0 0.0
    %358 = vmatprep.subr.mxu0 0.0
    %359 = vmatpush2.msra.mxu0 0.0
    %360 = vmatprep.subr.mxu0 0.0
    %361 = vmatpush2.msra.mxu0 0.0
    %362 = vmatprep.subr.mxu0 0.0
    %363 = vmatpush2.msra.mxu0 0.0
    %364 = vmatprep.subr.mxu0 0.0
    %365 = vmatpush2.msra.mxu0 0.0
    %366 = vmatprep.subr.mxu0 0.0
    %367 = vmatpush2.msra.mxu0 0.0
    %368 = vmatprep.subr.mxu0 0.0
    %369 = vmatpush2.msra.mxu0 0.0
    %370 = vmatprep.subr.mxu0 0.0
    %371 = vmatpush2.msra.mxu0 0.0
    %372 = vmatprep.subr.mxu0 0.0
    %373 = vmatpush2.msra.mxu0 0.0
    %374 = vmatprep.mubr.f32.mxu0 0.0
    %375 = vmatmul.mubr.f32.gmra.mxu0 %v237
    %v376 = vpop.f32.mrf.mxu0
    %v377 = vadd.f32 %v233, %v376
    %v378 = vpop.f32.mrf.mxu0
    %v379 = vadd.f32 %v233, %v378
    %380 = vdwg.mxu0
    %v385 = vcombine.low %v306, %v308
    %v386 = vcombine.low %v377, %v379
    %v388 = vunpack.c.l.s4 1983009808
    %v389 = vunpack.c.0.s8 %v388
    %v390 = vlaneseq
    %v391 = vshrl.u32 %v390, 7
    %v392 = vsub.s32 %v389, %v391
    %v393 = vrot.slane %v385, %v392
    %v395 = vunpack.c.l.s4 1983009808
    %v396 = vunpack.c.0.s8 %v395
    %v397 = vlaneseq
    %v398 = vshrl.u32 %v397, 7
    %v399 = vsub.s32 %v396, %v398
    %v400 = vrot.slane %v386, %v399
    %v401 = vcombine.low %v393, %v400
    %403 = vst [vmem:[#allocation7] sm:$0xff] %v401
    // Predicated region
    $region26: #{tpu_custom_call.1} parent=1 // pred_check
      _
    $region27: #{tpu_custom_call.1} parent=1 // pred_check_branch
      %405 = sbr.rel (0) target = $region29
    $region28: #{tpu_custom_call.1} parent=1 // pred_region
      %s407 = ssub.s32 128, 128
      %408 = vsyncadd [#allocation4], %s407
      %s410 = sshll.u32 [#allocation7], 4
      %s411 = int_to_ptr.vmem [resolvable:$true] %s410
      %413 = dma.vmem_to_hbm [thread:$0]  %s411, 128, %s4, [#allocation4]
    $region29: #{tpu_custom_call.1} parent=1 // pred_fallthru
      _
    // Predicated region
    $region30: #{tpu_custom_call.1} parent=1 // pred_check
      _
    $region31: #{tpu_custom_call.1} parent=1 // pred_check_branch
      %415 = sbr.rel (0) target = $region33
    $region32: #{tpu_custom_call.1} parent=1 // pred_region
      %416 = dma.done [#allocation4], 128
    $region33: #{tpu_custom_call.1} parent=1 // pred_fallthru
      _
    %417 = vsyncpa [#allocation3], 1
    %418 = vsyncpa [#allocation6], 1
    %419 = vsyncpa [#allocation4], 1

</llo_original>
